<compile_context>
chip_gen: v7x
topology: tpu7x:2x2x1
jax: 0.10.0
libtpu: 0.0.40
codegen_flags: <defaults>
</compile_context>

<pallas_src>
import math
from functools import partial

import jax
import jax.numpy as jnp
from jax.experimental import pallas as pl
from jax.experimental.pallas import tpu as pltpu


# ------------------------------ helpers ------------------------------

def _round_up(x, m):
    return ((x + m - 1) // m) * m


def _pick_tile(n, cap=512):
    """Largest tile <= cap dividing n (multiple of 8 unless it is n itself)."""
    if n <= cap:
        return n
    for t in range(cap, 0, -1):
        if n % t == 0 and t % 8 == 0:
            return t
    return n


# ------------------------- tiled matmul kernel -------------------------

def _matmul_kernel(a_ref, b_ref, o_ref, acc_ref, *, apply_relu):
    @pl.when(pl.program_id(2) == 0)
    def _init():
        acc_ref[...] = jnp.zeros_like(acc_ref)

    acc_ref[...] += jnp.dot(a_ref[...], b_ref[...],
                            preferred_element_type=jnp.float32)

    @pl.when(pl.program_id(2) == pl.num_programs(2) - 1)
    def _done():
        r = acc_ref[...]
        if apply_relu:
            r = jnp.maximum(r, 0.0)
        o_ref[...] = r.astype(o_ref.dtype)


def pallas_matmul(a, b, apply_relu=False, out_dtype=jnp.float32):
    """(M, K) @ (K, N) -> (M, N). bf16 MXU feeds, f32 accumulation, tiled grid."""
    M, K = a.shape
    K2, N = b.shape
    assert K == K2

    tm = min(256, _round_up(M, 8))        # 256-class tiles (good on v5e/v6e/v7x)
    tn = min(256, _round_up(N, 128))      # lane-dense output tiles (>=128 wide)
    if K <= 512:                          # single K step: full (unpadded) contraction
        tk, Kp = K, K
    else:
        tk = 256
        Kp = _round_up(K, tk)
    Mp = _round_up(M, tm)
    Np = _round_up(N, tn)

    a_p = a.astype(jnp.bfloat16)
    b_p = b.astype(jnp.bfloat16)
    if (Mp, Kp) != (M, K):
        a_p = jnp.pad(a_p, ((0, Mp - M), (0, Kp - K)))
    if (Kp, Np) != (K, N):
        b_p = jnp.pad(b_p, ((0, Kp - K), (0, Np - N)))

    out = pl.pallas_call(
        partial(_matmul_kernel, apply_relu=apply_relu),
        out_shape=jax.ShapeDtypeStruct((Mp, Np), out_dtype),
        grid=(Mp // tm, Np // tn, Kp // tk),
        in_specs=[pl.BlockSpec((tm, tk), lambda i, j, k: (i, k)),
                  pl.BlockSpec((tk, tn), lambda i, j, k: (k, j))],
        out_specs=pl.BlockSpec((tm, tn), lambda i, j, k: (i, j)),
        scratch_shapes=[pltpu.VMEM((tm, tn), jnp.float32)],
        compiler_params=pltpu.CompilerParams(
            dimension_semantics=("parallel", "parallel", "arbitrary"),
            vmem_limit_bytes=64 * 1024 * 1024),
    )(a_p, b_p)
    return out[:M, :N]


def linear_proj(x, w):
    """x: (N, L, Cin) @ w: (Cin, Cout) -> (N, L, Cout) via the tiled Pallas matmul."""
    N, L, C = x.shape
    return pallas_matmul(x.reshape(N * L, C), w).reshape(N, L, w.shape[1])


# ----------------------- linear attention kernel -----------------------

def _elu_p1(x):
    # elu(x) + 1 without expm1 (safer Mosaic lowering); keep elementwise math f32
    return jnp.where(x > 0, x + 1.0, jnp.exp(jnp.minimum(x, 0.0)))


def _linear_attention_kernel(q_ref, k_ref, v_ref, o_ref, *, nhead, head_dim):
    # one (batch) element per grid step; all heads fused -> lane-dense (L, C) output
    q = q_ref[0].astype(jnp.float32)          # (L, C)
    k = k_ref[0].astype(jnp.float32)          # (S, C)
    v = v_ref[0].astype(jnp.float32)          # (S, C)
    Q = _elu_p1(q)
    K = _elu_p1(k)
    outs = []
    for h in range(nhead):
        sl = slice(h * head_dim, (h + 1) * head_dim)
        Qh, Kh, Vh = Q[:, sl], K[:, sl], v[:, sl]
        # The original  v/S ... *S  pair cancels exactly, so it is dropped.
        KV = jax.lax.dot_general(Kh.astype(jnp.bfloat16), Vh.astype(jnp.bfloat16),
                                 (((0,), (0,)), ((), ())),
                                 preferred_element_type=jnp.float32)       # (D, D)
        k_sum = jnp.sum(Kh, axis=0, keepdims=True)                         # (1, D)
        Z = pl.reciprocal(jnp.sum(Qh * k_sum, axis=-1, keepdims=True) + 1e-6,
                          approx=True)                                     # (L, 1)
        outs.append(jnp.dot(Qh.astype(jnp.bfloat16), KV.astype(jnp.bfloat16),
                            preferred_element_type=jnp.float32) * Z)
    o_ref[0] = jnp.concatenate(outs, axis=-1)


def linear_attention(q, k, v, nhead):
    """LoFTR LinearAttention with heads folded in channels. (N,L,C),(N,S,C)->(N,L,C)."""
    N, L, C = q.shape
    S = k.shape[1]
    D = C // nhead
    kern = partial(_linear_attention_kernel, nhead=nhead, head_dim=D)
    return pl.pallas_call(
        kern,
        out_shape=jax.ShapeDtypeStruct((N, L, C), jnp.float32),
        grid=(N,),
        in_specs=[pl.BlockSpec((1, L, C), lambda n: (n, 0, 0)),
                  pl.BlockSpec((1, S, C), lambda n: (n, 0, 0)),
                  pl.BlockSpec((1, S, C), lambda n: (n, 0, 0))],
        out_specs=pl.BlockSpec((1, L, C), lambda n: (n, 0, 0)),
        compiler_params=pltpu.CompilerParams(dimension_semantics=("parallel",)),
    )(q.astype(jnp.bfloat16), k.astype(jnp.bfloat16), v.astype(jnp.bfloat16))


# ------------------ fused encoder "post" kernel (merge+LN+MLP) ------------------

def _ln_rows(v, g, b, eps=1e-5):
    mu = jnp.mean(v, axis=-1, keepdims=True)
    var = jnp.mean((v - mu) ** 2, axis=-1, keepdims=True)
    return (v - mu) * jax.lax.rsqrt(var + eps) * g + b


def _encoder_post_kernel(x_ref, m_ref, wm_ref, w1_ref, w2_ref,
                         g1_ref, b1_ref, g2_ref, b2_ref, o_ref):
    x = x_ref[...]                                                         # (tm, C) f32
    msg = jnp.dot(m_ref[...], wm_ref[...], preferred_element_type=jnp.float32)
    msg = _ln_rows(msg, g1_ref[...], b1_ref[...])
    h = jnp.concatenate([x, msg], axis=-1).astype(jnp.bfloat16)            # (tm, 2C)
    h = jax.nn.relu(jnp.dot(h, w1_ref[...], preferred_element_type=jnp.float32))
    m2 = jnp.dot(h.astype(jnp.bfloat16), w2_ref[...],
                 preferred_element_type=jnp.float32)
    m2 = _ln_rows(m2, g2_ref[...], b2_ref[...])
    o_ref[...] = x + m2


def encoder_post(p, x, msg):
    """merge -> LN1 -> MLP(cat) -> LN2 -> residual, fused in one pallas_call."""
    N, L, C = x.shape
    ntok = N * L
    tm = min(256, _round_up(ntok, 8))
    ntok_p = _round_up(ntok, tm)
    xf = x.reshape(ntok, C).astype(jnp.float32)
    mf = msg.reshape(ntok, C).astype(jnp.bfloat16)
    if ntok_p != ntok:
        xf = jnp.pad(xf, ((0, ntok_p - ntok), (0, 0)))
        mf = jnp.pad(mf, ((0, ntok_p - ntok), (0, 0)))
    g1 = p["ln1_g"].reshape(1, C)
    b1 = p["ln1_b"].reshape(1, C)
    g2 = p["ln2_g"].reshape(1, C)
    b2 = p["ln2_b"].reshape(1, C)
    row = lambda i: (i, 0)
    rep = lambda i: (0, 0)
    out = pl.pallas_call(
        _encoder_post_kernel,
        out_shape=jax.ShapeDtypeStruct((ntok_p, C), jnp.float32),
        grid=(ntok_p // tm,),
        in_specs=[pl.BlockSpec((tm, C), row),
                  pl.BlockSpec((tm, C), row),
                  pl.BlockSpec((C, C), rep),
                  pl.BlockSpec((2 * C, 2 * C), rep),
                  pl.BlockSpec((2 * C, C), rep),
                  pl.BlockSpec((1, C), rep),
                  pl.BlockSpec((1, C), rep),
                  pl.BlockSpec((1, C), rep),
                  pl.BlockSpec((1, C), rep)],
        out_specs=pl.BlockSpec((tm, C), row),
        compiler_params=pltpu.CompilerParams(dimension_semantics=("parallel",)),
    )(xf, mf, p["wmerge"], p["w1"], p["w2"], g1, b1, g2, b2)
    return out[:ntok].reshape(N, L, C)


def encoder_layer(p, x, source, nhead):
    """LoFTREncoderLayer (linear attention + fused merge/LN/MLP/residual)."""
    N, L, C = x.shape
    if source is x:                                    # self-attention: fused QKV matmul
        qkv = linear_proj(x, p["wqkv"])
        q, k, v = jnp.split(qkv, 3, axis=-1)
    else:                                              # cross-attention: Q + fused KV
        q = linear_proj(x, p["wqkv"][:, :C])
        kv = linear_proj(source, p["wqkv"][:, C:])
        k, v = jnp.split(kv, 2, axis=-1)
    msg = linear_attention(q, k, v, nhead)             # (N, L, C) f32
    return encoder_post(p, x, msg)


# --------------------- dual-softmax matching (two-pass) ---------------------

def _colstats_kernel(f0_ref, f1_ref, cmax_ref, csum_ref, *, scale):
    # online accumulation of per-column max / sum-exp over row tiles of sim
    sim = jax.lax.dot_general(f0_ref[0], f1_ref[0], (((1,), (1,)), ((), ())),
                              preferred_element_type=jnp.float32) * scale     # (tl, S)
    tile_max = jnp.max(sim, axis=0, keepdims=True)                            # (1, S)

    @pl.when(pl.program_id(1) == 0)
    def _init():
        cmax_ref[0] = jnp.full_like(cmax_ref[0], -jnp.inf)
        csum_ref[0] = jnp.zeros_like(csum_ref[0])

    old_max = cmax_ref[0]
    new_max = jnp.maximum(old_max, tile_max)
    csum_ref[0] = (csum_ref[0] * jnp.exp(old_max - new_max)
                   + jnp.sum(jnp.exp(sim - new_max), axis=0, keepdims=True))
    cmax_ref[0] = new_max


def _dual_softmax_kernel(f0_ref, f1_ref, cmax_ref, csum_ref, conf_ref, *, scale):
    sim = jax.lax.dot_general(f0_ref[0], f1_ref[0], (((1,), (1,)), ((), ())),
                              preferred_element_type=jnp.float32) * scale     # (tl, S)
    # row softmax (axis=1) is local to this row tile
    rmax = jnp.max(sim, axis=1, keepdims=True)
    rexp = jnp.exp(sim - rmax)
    row_sm = rexp * pl.reciprocal(jnp.sum(rexp, axis=1, keepdims=True), approx=True)
    # column softmax (axis=0) uses the precomputed global column stats
    col_sm = jnp.exp(sim - cmax_ref[0]) * pl.reciprocal(csum_ref[0], approx=True)
    conf_ref[0] = row_sm * col_sm


def dual_softmax_matching(feat_c0, feat_c1, temperature):
    """CoarseMatching confidence matrix, tiled over rows with exact column stats."""
    N, L, C = feat_c0.shape
    S = feat_c1.shape[1]
    scale = 1.0 / (C * temperature)        # (f0/sqrt(C)) @ (f1/sqrt(C))^T / temperature
    tl = _pick_tile(L, 512)
    n_l = L // tl
    f0 = feat_c0.astype(jnp.bfloat16)
    f1 = feat_c1.astype(jnp.bfloat16)

    cmax, csum = pl.pallas_call(
        partial(_colstats_kernel, scale=scale),
        out_shape=(jax.ShapeDtypeStruct((N, 1, S), jnp.float32),
                   jax.ShapeDtypeStruct((N, 1, S), jnp.float32)),
        grid=(N, n_l),
        in_specs=[pl.BlockSpec((1, tl, C), lambda n, l: (n, l, 0)),
                  pl.BlockSpec((1, S, C), lambda n, l: (n, 0, 0))],
        out_specs=(pl.BlockSpec((1, 1, S), lambda n, l: (n, 0, 0)),
                   pl.BlockSpec((1, 1, S), lambda n, l: (n, 0, 0))),
        compiler_params=pltpu.CompilerParams(
            dimension_semantics=("parallel", "arbitrary"),
            vmem_limit_bytes=64 * 1024 * 1024),
    )(f0, f1)

    conf = pl.pallas_call(
        partial(_dual_softmax_kernel, scale=scale),
        out_shape=jax.ShapeDtypeStruct((N, L, S), jnp.float32),
        grid=(N, n_l),
        in_specs=[pl.BlockSpec((1, tl, C), lambda n, l: (n, l, 0)),
                  pl.BlockSpec((1, S, C), lambda n, l: (n, 0, 0)),
                  pl.BlockSpec((1, 1, S), lambda n, l: (n, 0, 0)),
                  pl.BlockSpec((1, 1, S), lambda n, l: (n, 0, 0))],
        out_specs=pl.BlockSpec((1, tl, S), lambda n, l: (n, l, 0)),
        compiler_params=pltpu.CompilerParams(
            dimension_semantics=("parallel", "parallel"),
            vmem_limit_bytes=64 * 1024 * 1024),
    )(f0, f1, cmax, csum)
    return conf


# -------------------- fine-window gather (FinePreprocess) --------------------

def _window_gather_kernel(b_ref, y_ref, x_ref, feat_ref, o_ref, buf, sem, *, win):
    m = pl.program_id(0)
    b = b_ref[m]
    y = y_ref[m]
    x = x_ref[m]
    cp = pltpu.make_async_copy(
        feat_ref.at[b, pl.ds(y, win), pl.ds(x, win)], buf, sem)
    cp.start()
    cp.wait()
    o_ref[0] = buf[...]


def extract_windows(feat_f, b_ids, ids, w_c, stride, win):
    """FinePreprocess unfold: win x win window around each coarse match.

    Data-dependent gather: window centers are prefetched to SMEM and drive
    manual DMAs from the padded fine feature map held in HBM (pl.ANY).
    """
    N, Hf, Wf, C = feat_f.shape
    pad = win // 2
    fp = jnp.pad(feat_f, ((0, 0), (pad, pad), (pad, pad), (0, 0)))
    ys = ((ids // w_c) * stride).astype(jnp.int32)
    xs = ((ids % w_c) * stride).astype(jnp.int32)
    M = b_ids.shape[0]

    out = pl.pallas_call(
        partial(_window_gather_kernel, win=win),
        out_shape=jax.ShapeDtypeStruct((M, win, win, C), feat_f.dtype),
        grid_spec=pltpu.PrefetchScalarGridSpec(
            num_scalar_prefetch=3,
            grid=(M,),
            in_specs=[pl.BlockSpec(memory_space=pl.ANY)],
            out_specs=pl.BlockSpec((1, win, win, C), lambda m, b, y, x: (m, 0, 0, 0)),
            scratch_shapes=[pltpu.VMEM((win, win, C), feat_f.dtype),
                            pltpu.SemaphoreType.DMA],
        ),
        compiler_params=pltpu.CompilerParams(dimension_semantics=("arbitrary",)),
    )(b_ids.astype(jnp.int32), ys, xs, fp)
    return out.reshape(M, win * win, C)


# ------------------------------ backbone ------------------------------

def im2col3x3(x, stride):
    N, H, W, C = x.shape
    xp = jnp.pad(x, ((0, 0), (1, 1), (1, 1), (0, 0)))
    Ho = (H + 2 - 3) // stride + 1
    Wo = (W + 2 - 3) // stride + 1
    cols = []
    for dy in range(3):
        for dx in range(3):
            cols.append(xp[:, dy:dy + stride * (Ho - 1) + 1:stride,
                           dx:dx + stride * (Wo - 1) + 1:stride, :])
    return jnp.concatenate(cols, axis=-1), Ho, Wo


def conv3x3(x, w, stride=1, relu=True):
    """3x3 conv (pad 1) as im2col + tiled Pallas matmul (ReLU fused in-kernel)."""
    # TODO(synk): fuse the 9-tap im2col into the matmul kernel (shifted VMEM reads)
    # to avoid the 9x HBM materialization at production image sizes.
    patches, Ho, Wo = im2col3x3(x, stride)
    N = x.shape[0]
    y = pallas_matmul(patches.reshape(-1, patches.shape[-1]), w, apply_relu=relu)
    return y.reshape(N, Ho, Wo, w.shape[-1])


def backbone(p, img_nhwc):
    """Simplified ResNetFPN_8_2: coarse feats at 1/8, fine feats at 1/2."""
    # TODO(synk): full ResNet blocks + FPN top-down fusion omitted (synthetic weights).
    x1 = conv3x3(img_nhwc, p["c1"], stride=2)            # 1/2
    x2 = conv3x3(x1, p["c2"], stride=2)                  # 1/4
    feat_c = conv3x3(x2, p["c3"], stride=2)              # 1/8, d_model
    feat_f = conv3x3(x1, p["cf"], stride=1, relu=False)  # 1/2, d_fine
    return feat_c, feat_f


def position_encoding_sine(d_model, H, W):
    # PositionEncodingSine (temp_bug_fix=True path)
    y_pos = jnp.cumsum(jnp.ones((H, W), jnp.float32), axis=0)
    x_pos = jnp.cumsum(jnp.ones((H, W), jnp.float32), axis=1)
    div_term = jnp.exp(jnp.arange(0, d_model // 2, 2, dtype=jnp.float32)
                       * (-math.log(10000.0) / (d_model // 2)))
    div_term = div_term[:, None, None]
    pe = jnp.zeros((d_model, H, W), jnp.float32)
    pe = pe.at[0::4].set(jnp.sin(x_pos[None] * div_term))
    pe = pe.at[1::4].set(jnp.cos(x_pos[None] * div_term))
    pe = pe.at[2::4].set(jnp.sin(y_pos[None] * div_term))
    pe = pe.at[3::4].set(jnp.cos(y_pos[None] * div_term))
    return jnp.transpose(pe, (1, 2, 0))                  # (H, W, C)


# ------------------------------ parameters ------------------------------

def _init_linear(key, fan_in, fan_out):
    w = jax.random.normal(key, (fan_in, fan_out), jnp.float32) / math.sqrt(fan_in)
    return w.astype(jnp.bfloat16)        # bf16 weights: native MXU input dtype


def _init_encoder_layer(key, d_model):
    ks = jax.random.split(key, 4)
    return {
        "wqkv": _init_linear(ks[0], d_model, 3 * d_model),   # fused Q|K|V projection
        "wmerge": _init_linear(ks[1], d_model, d_model),
        "w1": _init_linear(ks[2], 2 * d_model, 2 * d_model),
        "w2": _init_linear(ks[3], 2 * d_model, d_model),
        "ln1_g": jnp.ones((d_model,), jnp.float32),
        "ln1_b": jnp.zeros((d_model,), jnp.float32),
        "ln2_g": jnp.ones((d_model,), jnp.float32),
        "ln2_b": jnp.zeros((d_model,), jnp.float32),
    }


def init_params(key, cfg):
    kb, kc, kf = jax.random.split(key, 3)
    kb1, kb2, kb3, kb4 = jax.random.split(kb, 4)
    d_model, d_fine, c_mid = cfg["d_model"], cfg["d_fine"], cfg["c_mid"]
    return {
        "backbone": {
            "c1": _init_linear(kb1, 9 * 1, d_fine),
            "c2": _init_linear(kb2, 9 * d_fine, c_mid),
            "c3": _init_linear(kb3, 9 * c_mid, d_model),
            "cf": _init_linear(kb4, 9 * d_fine, d_fine),
        },
        "coarse_layers": [_init_encoder_layer(k, d_model)
                          for k in jax.random.split(kc, len(cfg["coarse_layers"]))],
        "fine_layers": [_init_encoder_layer(k, d_fine)
                        for k in jax.random.split(kf, len(cfg["fine_layers"]))],
    }


# ------------------------------ forward pass ------------------------------

def loftr_forward(params, cfg, image0, image1):
    N = image0.shape[0]
    H0i, W0i = image0.shape[2:]
    H1i, W1i = image1.shape[2:]
    assert (H0i, W0i) == (H1i, W1i)  # demo uses the shared-backbone branch

    # NCHW -> NHWC, run backbone on concatenated batch (hw0_i == hw1_i branch)
    img = jnp.concatenate([image0, image1], axis=0).transpose(0, 2, 3, 1)
    feat_c, feat_f = backbone(params["backbone"], img)
    feat_c0, feat_c1 = feat_c[:N], feat_c[N:]
    feat_f0, feat_f1 = feat_f[:N], feat_f[N:]
    _, Hc, Wc, C = feat_c0.shape
    Hf, Wf = feat_f0.shape[1:3]
    L = Hc * Wc

    # positional encoding + flatten to (N, L, C)
    pe = position_encoding_sine(C, Hc, Wc)
    feat_c0 = (feat_c0 + pe[None]).reshape(N, L, C)
    feat_c1 = (feat_c1 + pe[None]).reshape(N, L, C)

    # coarse LocalFeatureTransformer (self/cross linear attention)
    for lp, name in zip(params["coarse_layers"], cfg["coarse_layers"]):
        if name == "self":
            feat_c0 = encoder_layer(lp, feat_c0, feat_c0, cfg["nhead_c"])
            feat_c1 = encoder_layer(lp, feat_c1, feat_c1, cfg["nhead_c"])
        else:
            feat_c0 = encoder_layer(lp, feat_c0, feat_c1, cfg["nhead_c"])
            feat_c1 = encoder_layer(lp, feat_c1, feat_c0, cfg["nhead_c"])

    # CoarseMatching: dual-softmax confidence matrix
    conf = dual_softmax_matching(feat_c0, feat_c1, cfg["temperature"])    # (N, L, L)

    # mutual nearest neighbour via argmax indices (no float equality)
    j_ids_2d = jnp.argmax(conf, axis=2).astype(jnp.int32)                 # (N, L)
    i_best = jnp.argmax(conf, axis=1).astype(jnp.int32)                   # (N, S)
    mconf_2d = jnp.max(conf, axis=2)                                      # (N, L)
    mutual_2d = i_best[jnp.arange(N)[:, None], j_ids_2d] == \
        jnp.arange(L, dtype=jnp.int32)[None, :]

    b_ids = jnp.repeat(jnp.arange(N, dtype=jnp.int32), L)
    i_ids = jnp.tile(jnp.arange(L, dtype=jnp.int32), N)
    j_ids = j_ids_2d.reshape(-1)
    mconf = mconf_2d.reshape(-1)
    valid = mutual_2d.reshape(-1) & (mconf > cfg["thr"])
    # TODO(synk): the torch module returns only the NC valid matches via nonzero()
    # (dynamic shape); here all N*L candidates are returned + a `valid` mask.

    scale_c = H0i // Hc
    mkpts0_c = jnp.stack([(i_ids % Wc) * scale_c, (i_ids // Wc) * scale_c],
                         axis=1).astype(jnp.float32)
    mkpts1_c = jnp.stack([(j_ids % Wc) * scale_c, (j_ids // Wc) * scale_c],
                         axis=1).astype(jnp.float32)

    # FinePreprocess: unfold WxW windows around each coarse match (Pallas DMA gather)
    Wwin = cfg["fine_window"]
    stride_f = Hf // Hc
    f0_unf = extract_windows(feat_f0, b_ids, i_ids, Wc, stride_f, Wwin)   # (M, WW, Cf)
    f1_unf = extract_windows(feat_f1, b_ids, j_ids, Wc, stride_f, Wwin)
    # TODO(synk): FinePreprocess cat_c_feat (down-projected coarse feature merge) omitted.

    # fine LocalFeatureTransformer
    for lp, name in zip(params["fine_layers"], cfg["fine_layers"]):
        if name == "self":
            f0_unf = encoder_layer(lp, f0_unf, f0_unf, cfg["nhead_f"])
            f1_unf = encoder_layer(lp, f1_unf, f1_unf, cfg["nhead_f"])
        else:
            f0_unf = encoder_layer(lp, f0_unf, f1_unf, cfg["nhead_f"])
            f1_unf = encoder_layer(lp, f1_unf, f0_unf, cfg["nhead_f"])

    # FineMatching: heatmap softmax + spatial expectation (sub-pixel refine)
    M, WW, Cf = f0_unf.shape
    center = f0_unf[:, WW // 2, :]
    sim = jnp.einsum("mc,mrc->mr", center, f1_unf)
    heat = jax.nn.softmax(sim / math.sqrt(Cf), axis=1).reshape(M, Wwin, Wwin)
    grid1d = jnp.linspace(-1.0, 1.0, Wwin)
    exp_x = jnp.sum(heat * grid1d[None, None, :], axis=(1, 2))
    exp_y = jnp.sum(heat * grid1d[None, :, None], axis=(1, 2))
    coords = jnp.stack([exp_x, exp_y], axis=1)
    scale_f = H0i // Hf
    mkpts1_f = mkpts1_c + coords * (Wwin // 2) * scale_f

    return {
        "keypoints0": mkpts0_c,        # mkpts0_f == mkpts0_c in LoFTR
        "keypoints1": mkpts1_f,
        "confidence": mconf,
        "batch_indexes": b_ids,
        "valid": valid,
    }


# --------------------------------- main ---------------------------------

if __name__ == "__main__":
    cfg = dict(
        d_model=32, nhead_c=4,          # coarse transformer
        d_fine=16, nhead_f=2,           # fine transformer
        c_mid=32,
        coarse_layers=("self", "cross", "self", "cross"),
        fine_layers=("self", "cross"),
        fine_window=5,
        temperature=0.1,
        thr=0.2,
    )
    key = jax.random.PRNGKey(0)
    kp, k0, k1 = jax.random.split(key, 3)
    params = init_params(kp, cfg)

    # small shapes: batch=2, grayscale 32x32 -> coarse 4x4 (L=16), fine 16x16
    image0 = jax.random.uniform(k0, (2, 1, 32, 32), jnp.float32)
    image1 = jax.random.uniform(k1, (2, 1, 32, 32), jnp.float32)

    out = loftr_forward(params, cfg, image0, image1)
    jax.block_until_ready(out)
    assert out["keypoints0"].shape == (2 * 16, 2)
    assert out["keypoints1"].shape == (2 * 16, 2)
    assert out["confidence"].shape == (2 * 16,)
    assert bool(jnp.all(jnp.isfinite(out["keypoints1"])))
    print("KERNEL_OK")
</pallas_src>

<mosaic_0001>
module attributes {stable_mosaic.version = 11 : i64} {
  func.func @_matmul_kernel(%arg0: i32, %arg1: i32, %arg2: i32, %arg3: memref<256x9xbf16, #tpu.memory_space<vmem>>, %arg4: memref<9x128xbf16, #tpu.memory_space<vmem>>, %arg5: memref<256x128xf32, #tpu.memory_space<vmem>>, %arg6: memref<256x128xf32, #tpu.memory_space<vmem>>) attributes {dimension_semantics = [#tpu.dimension_semantics<parallel>, #tpu.dimension_semantics<parallel>, #tpu.dimension_semantics<arbitrary>], iteration_bounds = array<i64: 4, 1, 1>, scalar_prefetch = 0 : i64, scratch_operands = 1 : i64, tpu.core_type = #tpu.core_type<tc>, window_params = [{transform_indices = @transform_0, window_bounds = array<i64: 256, 9>}, {transform_indices = @transform_1, window_bounds = array<i64: 9, 128>}, {transform_indices = @transform_2, window_bounds = array<i64: 256, 128>}]} {
    %c0_i32 = arith.constant 0 : i32
    %0 = arith.cmpi eq, %arg2, %c0_i32 : i32
    %1 = arith.extui %0 : i1 to i32
    %c0_i32_0 = arith.constant 0 : i32
    %2 = arith.cmpi ne, %1, %c0_i32_0 : i32
    scf.if %2 {
      %cst_10 = arith.constant 0.000000e+00 : f32
      %12 = vector.broadcast %cst_10 : f32 to vector<256x128xf32>
      %c0_11 = arith.constant 0 : index
      %c0_12 = arith.constant 0 : index
      %13 = vector.load %arg6[%c0_11, %c0_12] : memref<256x128xf32, #tpu.memory_space<vmem>>, vector<256x128xf32>
      tpu.vector_store %arg6[%c0_11, %c0_12], %12 {strides = array<i32>} : memref<256x128xf32, #tpu.memory_space<vmem>>, vector<256x128xf32>,
    } else {
    }
    %c0 = arith.constant 0 : index
    %c0_1 = arith.constant 0 : index
    %3 = vector.load %arg6[%c0, %c0_1] : memref<256x128xf32, #tpu.memory_space<vmem>>, vector<256x128xf32>
    %c0_2 = arith.constant 0 : index
    %c0_3 = arith.constant 0 : index
    %4 = vector.load %arg3[%c0_2, %c0_3] : memref<256x9xbf16, #tpu.memory_space<vmem>>, vector<256x9xbf16>
    %c0_4 = arith.constant 0 : index
    %c0_5 = arith.constant 0 : index
    %5 = vector.load %arg4[%c0_4, %c0_5] : memref<9x128xbf16, #tpu.memory_space<vmem>>, vector<9x128xbf16>
    %cst = arith.constant dense<0.000000e+00> : vector<256x128xf32>
    %6 = tpu.matmul %4, %5, %cst {dimension_numbers = #tpu.dot_dimension_numbers<[1], [0], [0], [1], [0, 0, 1, 1], [], []>} : vector<256x9xbf16>, vector<9x128xbf16>, vector<256x128xf32> -> vector<256x128xf32>
    %7 = arith.addf %3, %6 : vector<256x128xf32>
    %c0_6 = arith.constant 0 : index
    %c0_7 = arith.constant 0 : index
    %8 = vector.load %arg6[%c0_6, %c0_7] : memref<256x128xf32, #tpu.memory_space<vmem>>, vector<256x128xf32>
    tpu.vector_store %arg6[%c0_6, %c0_7], %7 {strides = array<i32>} : memref<256x128xf32, #tpu.memory_space<vmem>>, vector<256x128xf32>,
    %c0_i32_8 = arith.constant 0 : i32
    %9 = arith.cmpi eq, %arg2, %c0_i32_8 : i32
    %10 = arith.extui %9 : i1 to i32
    %c0_i32_9 = arith.constant 0 : i32
    %11 = arith.cmpi ne, %10, %c0_i32_9 : i32
    scf.if %11 {
      %c0_10 = arith.constant 0 : index
      %c0_11 = arith.constant 0 : index
      %12 = vector.load %arg6[%c0_10, %c0_11] : memref<256x128xf32, #tpu.memory_space<vmem>>, vector<256x128xf32>
      %cst_12 = arith.constant 0.000000e+00 : f32
      %13 = vector.broadcast %cst_12 : f32 to vector<256x128xf32>
      %14 = arith.maximumf %12, %13 : vector<256x128xf32>
      %c0_13 = arith.constant 0 : index
      %c0_14 = arith.constant 0 : index
      %15 = vector.load %arg5[%c0_13, %c0_14] : memref<256x128xf32, #tpu.memory_space<vmem>>, vector<256x128xf32>
      tpu.vector_store %arg5[%c0_13, %c0_14], %14 {strides = array<i32>} : memref<256x128xf32, #tpu.memory_space<vmem>>, vector<256x128xf32>,
    } else {
    }
    return
  }
  func.func @transform_0(%arg0: i32, %arg1: i32, %arg2: i32) -> (i32, i32) {
    %c0_i32 = arith.constant 0 : i32
    return %arg0, %arg2 : i32, i32
  }
  func.func @transform_1(%arg0: i32, %arg1: i32, %arg2: i32) -> (i32, i32) {
    %c0_i32 = arith.constant 0 : i32
    return %arg2, %arg1 : i32, i32
  }
  func.func @transform_2(%arg0: i32, %arg1: i32, %arg2: i32) -> (i32, i32) {
    %c0_i32 = arith.constant 0 : i32
    return %arg0, %arg1 : i32, i32
  }
}

</mosaic_0001>

<llo_original>
// kernel: tpu_custom_call.1
$region0: #{tpu_custom_call.1}
  #allocation0 [shape = 'u32[]', space=smem, size = 0x4, offset = 0x4, fixed_abs, tag = 'smem constant byte address 0x4 - core index']
  #allocation1 [shape = 'u32[144,128]{1,0:T(1,128)}', space=vmem, size = 0x12000, scoped, tag = 'internal scratch']
  #allocation2 [shape = 'f32[256,128]{1,0:T(8,128)}', space=vmem, size = 0x20000, scoped, tag = 'scratch operand']
  %s0 = inlined_call_operand.hbm [shape: bf16[1024,9], index: 0, kind: input, shape index: {}]
  %s1 = inlined_call_operand.hbm [shape: bf16[9,128], index: 1, kind: input, shape index: {}]
  %s2 = inlined_call_operand.hbm [shape: f32[1024,128], index: 2, kind: output, shape index: {}]
  %s3 = sld [smem:[#allocation0]]
  $region57: #{tpu_custom_call.1} parent=0
    _
  %s5 = ssub.s32 1, %s3
  %s6 = scalar_select 0, %s5, %s3
  $region1: #{tpu_custom_call.1} parent=0
    #allocation3 [shape = 'u8[131072]{0}', space=vmem, size = 0x20000, scoped, tag = 'input window, operand 0']
    #allocation4 [shape = 's32[2]{0}', space=sflag, size = 0x8, scoped, tag = 'scoped memory for tpu_custom_call.1']
    #allocation5 [shape = 's32[2]{0}', space=sflag, size = 0x8, scoped, tag = 'scoped memory for tpu_custom_call.1']
    #allocation6 [shape = 'u8[4096]{0}', space=vmem, size = 0x1000, scoped, tag = 'input window, operand 1, single buffered']
    #allocation7 [shape = 's32[1]{0}', space=sflag, size = 0x4, scoped, tag = 'scoped memory for tpu_custom_call.1']
    #allocation8 [shape = 'u8[262144]{0}', space=vmem, size = 0x40000, scoped, tag = 'output window, operand 0']
    %7 = vsyncpa [#allocation4], 0
    %s8 = scalar_lea.sflag [#allocation4], 1
    %9 = vsyncpa %s8, 0
    %10 = vsyncpa [#allocation7], 0
    %11 = vsyncpa [#allocation5], 0
    %s12 = scalar_lea.sflag [#allocation5], 1
    %13 = vsyncpa %s12, 0
    loop: start=0, step=1, limit=6
    $region2: #{tpu_custom_call.1} parent=1 // loop_pre_header
      _
    $region3: #{tpu_custom_call.1} parent=1 // loop_header
      %s15 = sphi 0, %s19
      %p16 = scmp.ge.s32.totalorder %s15, 6
      %s22 = sphi 0, %s41
      %s23 = sphi 0, %s37
      %s24 = sphi 0, %s33
      %s25 = sphi 0, %s22
      %s26 = sphi 0, %s23
      %s27 = sphi 0, %s24
      %s28 = sphi 0, %s25
      %s29 = sphi 0, %s26
      %s30 = sphi 0, %s27
      %s46 = sphi 0, %s48
      %s49 = sphi 0, %s46
      %s50 = sphi 0, %s49
      %s66 = sphi 0, %s50
      %s74 = sphi 0, %s76
      %s77 = sphi 0, %s74
      %s78 = sphi 0, %s77
      %s94 = sphi 0, %s78
      %s102 = sphi 0, %s104
      %s105 = sphi 0, %s102
      %s106 = sphi 0, %s105
      %s122 = sphi 0, %s106
    $region4: #{tpu_custom_call.1} parent=1 // loop_header_branch
      %18 = sbr.rel (%p16) target = $region8
    $region5: #{tpu_custom_call.1} parent=1 // loop_body
      %s20 = ssub.s32 %s15, 1
      %s21 = ssub.s32 %s15, 2
      %s31 = sadd.s32 1, %s24
      %p32 = scmp.ge.s32.totalorder %s31, 1
      %s33 = scalar_select %p32, 0, %s31
      %s34 = sadd.s32 1, %s23
      %s35 = scalar_select %p32, %s34, %s23
      %p36 = scmp.ge.s32.totalorder %s35, 1
      %s37 = scalar_select %p36, 0, %s35
      %s38 = sadd.s32 1, %s22
      %s39 = scalar_select %p36, %s38, %s22
      %p40 = scmp.ge.s32.totalorder %s39, 4
      %s41 = scalar_select %p40, 0, %s39
      %s42 = ssub.s32 %s22, %s41
      %s43 = ssub.s32 %s24, %s33
      %s44 = sor.u32 %s42, %s43
      %p45 = scmp.eq.s32.totalorder %s44, 0
      %s47 = sadd.s32 %s46, 1
      %s48 = scalar_select %p45, %s46, %s47
      %p51 = pneg %p45
      %p52 = scmp.eq.s32.totalorder %s15, 3
      %p53 = por %p51, %p52
      %p54 = scmp.ne.s32.totalorder %s46, %s49
      %p55 = scmp.eq.s32.totalorder %s15, 0
      %p56 = por %p54, %p55
      %p57 = scmp.ne.s32.totalorder %s46, %s49
      %p58 = scmp.eq.s32.totalorder %s20, 3
      %p59 = por %p57, %p58
      %p60 = scmp.ne.s32.totalorder %s49, %s50
      %p61 = scmp.eq.s32.totalorder %s20, 0
      %p62 = por %p60, %p61
      %p63 = scmp.ne.s32.totalorder %s49, %s50
      %p64 = scmp.eq.s32.totalorder %s21, 3
      %p65 = por %p63, %p64
      %p67 = scmp.ne.s32.totalorder %s50, %s66
      %p68 = scmp.eq.s32.totalorder %s21, 0
      %p69 = por %p67, %p68
      %s70 = ssub.s32 %s24, %s33
      %s71 = ssub.s32 %s23, %s37
      %s72 = sor.u32 %s70, %s71
      %p73 = scmp.eq.s32.totalorder %s72, 0
      %s75 = sadd.s32 %s74, 1
      %s76 = scalar_select %p73, %s74, %s75
      %p79 = pneg %p73
      %p80 = scmp.eq.s32.totalorder %s15, 3
      %p81 = por %p79, %p80
      %p82 = scmp.ne.s32.totalorder %s74, %s77
      %p83 = scmp.eq.s32.totalorder %s15, 0
      %p84 = por %p82, %p83
      %p85 = scmp.ne.s32.totalorder %s74, %s77
      %p86 = scmp.eq.s32.totalorder %s20, 3
      %p87 = por %p85, %p86
      %p88 = scmp.ne.s32.totalorder %s77, %s78
      %p89 = scmp.eq.s32.totalorder %s20, 0
      %p90 = por %p88, %p89
      %p91 = scmp.ne.s32.totalorder %s77, %s78
      %p92 = scmp.eq.s32.totalorder %s21, 3
      %p93 = por %p91, %p92
      %p95 = scmp.ne.s32.totalorder %s78, %s94
      %p96 = scmp.eq.s32.totalorder %s21, 0
      %p97 = por %p95, %p96
      %s98 = ssub.s32 %s22, %s41
      %s99 = ssub.s32 %s23, %s37
      %s100 = sor.u32 %s98, %s99
      %p101 = scmp.eq.s32.totalorder %s100, 0
      %s103 = sadd.s32 %s102, 1
      %s104 = scalar_select %p101, %s102, %s103
      %p107 = pneg %p101
      %p108 = scmp.eq.s32.totalorder %s15, 3
      %p109 = por %p107, %p108
      %p110 = scmp.ne.s32.totalorder %s102, %s105
      %p111 = scmp.eq.s32.totalorder %s15, 0
      %p112 = por %p110, %p111
      %p113 = scmp.ne.s32.totalorder %s102, %s105
      %p114 = scmp.eq.s32.totalorder %s20, 3
      %p115 = por %p113, %p114
      %p116 = scmp.ne.s32.totalorder %s105, %s106
      %p117 = scmp.eq.s32.totalorder %s20, 0
      %p118 = por %p116, %p117
      %p119 = scmp.ne.s32.totalorder %s105, %s106
      %p120 = scmp.eq.s32.totalorder %s21, 3
      %p121 = por %p119, %p120
      %p123 = scmp.ne.s32.totalorder %s106, %s122
      %p124 = scmp.eq.s32.totalorder %s21, 0
      %p125 = por %p123, %p124
      %p126 = scmp.le.s32.totalorder 1, %s15
      %p127 = scmp.lt.s32.totalorder %s15, 5
      %p128 = pnand %p126, %p127
      %p129 = pneg %p128
      // Predicated region
      $region9: #{tpu_custom_call.1} parent=5 // pred_check
        _
      $region10: #{tpu_custom_call.1} parent=5 // pred_check_branch
        %131 = sbr.rel (%p128) target = $region12
      $region11: #{tpu_custom_call.1} parent=5 // pred_region
        %s132 = ssub.s32 %s15, 1
        // Predicated region
        $region13: #{tpu_custom_call.1} parent=11 // pred_check
          %p133 = pneg %p90
        $region14: #{tpu_custom_call.1} parent=11 // pred_check_branch
          %135 = sbr.rel (%p133) target = $region16
        $region15: #{tpu_custom_call.1} parent=11 // pred_region
          %s136 = smul.u32 2, %s27
          %s138 = ssub.s32 128, 128
          %139 = vsyncadd [#allocation7], %s138
          %s140 = sadd.s32 %s26, %s136
          %s141 = smul.addr %s140, 64
          %s142 = scalar_lea.hbm %s1, %s141
          %s143 = sshll.u32 [#allocation6], 4
          %s144 = int_to_ptr.vmem [resolvable:$true] %s143
          %149 = dma.hbm_to_vmem [thread:$0]  %s142, 128, %s144, [#allocation7], 64, 64, 4
        $region16: #{tpu_custom_call.1} parent=11 // pred_fallthru
          _
      $region12: #{tpu_custom_call.1} parent=5 // pred_fallthru
        _
      %p150 = scmp.lt.s32.totalorder %s15, 4
      // Predicated region
      $region17: #{tpu_custom_call.1} parent=5 // pred_check
        %p151 = pneg %p150
      $region18: #{tpu_custom_call.1} parent=5 // pred_check_branch
        %153 = sbr.rel (%p151) target = $region20
      $region19: #{tpu_custom_call.1} parent=5 // pred_region
        // Predicated region
        $region21: #{tpu_custom_call.1} parent=19 // pred_check
          %p154 = pneg %p56
        $region22: #{tpu_custom_call.1} parent=19 // pred_check_branch
          %156 = sbr.rel (%p154) target = $region24
        $region23: #{tpu_custom_call.1} parent=19 // pred_region
          %s157 = sand.u32 %s46, 1
          %s158 = scalar_lea.sflag [#allocation4], %s157
          %s159 = sand.u32 %s46, 1
          %s160 = smul.addr %s159, 128
          %s161 = scalar_lea.vmem [#allocation3], %s160
          %s162 = smul.u32 32, %s22
          %s164 = ssub.s32 2048, 2048
          %165 = vsyncadd %s158, %s164
          %s166 = sadd.s32 %s24, %s162
          %s167 = smul.addr %s166, 64
          %s168 = scalar_lea.hbm %s0, %s167
          %s169 = sshll.u32 %s161, 4
          %s170 = int_to_ptr.vmem [resolvable:$true] %s169
          %175 = dma.hbm_to_vmem [thread:$0]  %s168, 2048, %s170, %s158, 64, 64, 4
        $region24: #{tpu_custom_call.1} parent=19 // pred_fallthru
          _
      $region20: #{tpu_custom_call.1} parent=5 // pred_fallthru
        _
      %p176 = scmp.le.s32.totalorder 1, %s15
      %p177 = scmp.lt.s32.totalorder %s15, 5
      %p178 = pnand %p176, %p177
      %p179 = pneg %p178
      // Predicated region
      $region25: #{tpu_custom_call.1} parent=5 // pred_check
        _
      $region26: #{tpu_custom_call.1} parent=5 // pred_check_branch
        %181 = sbr.rel (%p178) target = $region28
      $region27: #{tpu_custom_call.1} parent=5 // pred_region
        %s182 = ssub.s32 %s15, 1
        %s183 = sand.u32 %s49, 1
        %s184 = scalar_lea.sflag [#allocation4], %s183
        %s185 = sand.u32 %s49, 1
        %s186 = smul.addr %s185, 128
        %s187 = scalar_lea.vmem [#allocation3], %s186
        // Predicated region
        $region29: #{tpu_custom_call.1} parent=27 // pred_check
          %p188 = pneg %p62
        $region30: #{tpu_custom_call.1} parent=27 // pred_check_branch
          %190 = sbr.rel (%p188) target = $region32
        $region31: #{tpu_custom_call.1} parent=27 // pred_region
          %191 = dma.done %s184, 2048
        $region32: #{tpu_custom_call.1} parent=27 // pred_fallthru
          _
        // Predicated region
        $region33: #{tpu_custom_call.1} parent=27 // pred_check
          %p192 = pneg %p90
        $region34: #{tpu_custom_call.1} parent=27 // pred_check_branch
          %194 = sbr.rel (%p192) target = $region36
        $region35: #{tpu_custom_call.1} parent=27 // pred_region
          %195 = dma.done [#allocation7], 128
        $region36: #{tpu_custom_call.1} parent=27 // pred_fallthru
          _
        %s196 = sand.u32 %s49, 1
        %s197 = scalar_lea.sflag [#allocation4], %s196
        %s198 = sand.u32 %s49, 1
        %s199 = smul.addr %s198, 128
        %s200 = scalar_lea.vmem [#allocation3], %s199
        %p201 = pneg %p62
        %p202 = pneg %p59
        %p203 = pneg %p90
        %p204 = pneg %p87
        %p205 = pneg %p118
        %p206 = pneg %p115
        %s207 = sand.u32 %s105, 1
        %s208 = scalar_lea.sflag [#allocation5], %s207
        %s209 = sand.u32 %s105, 1
        %s210 = smul.addr %s209, 256
        %s211 = scalar_lea.vmem [#allocation8], %s210
        %s212 = smul.u32 32, %s25
        %s213 = smul.u32 2, %s27
        %s214 = smul.u32 32, %s25
        %p216 = scmp.eq.s32.totalorder %s27, 0
        // Predicated region
        $region37: #{tpu_custom_call.1} parent=27 // pred_check
          %p217 = pneg %p216
        $region38: #{tpu_custom_call.1} parent=27 // pred_check_branch
          %219 = sbr.rel (%p217) target = $region40
        $region39: #{tpu_custom_call.1} parent=27 // pred_region
          %220 = vst [vmem:[#allocation2] sm:$0xff] 0.0
          %221 = vst [vmem:[#allocation2 + $0x8] sm:$0xff] 0.0
          %222 = vst [vmem:[#allocation2 + $0x10] sm:$0xff] 0.0
          %223 = vst [vmem:[#allocation2 + $0x18] sm:$0xff] 0.0
          %224 = vst [vmem:[#allocation2 + $0x20] sm:$0xff] 0.0
          %225 = vst [vmem:[#allocation2 + $0x28] sm:$0xff] 0.0
          %226 = vst [vmem:[#allocation2 + $0x30] sm:$0xff] 0.0
          %227 = vst [vmem:[#allocation2 + $0x38] sm:$0xff] 0.0
          %228 = vst [vmem:[#allocation2 + $0x40] sm:$0xff] 0.0
          %229 = vst [vmem:[#allocation2 + $0x48] sm:$0xff] 0.0
          %230 = vst [vmem:[#allocation2 + $0x50] sm:$0xff] 0.0
          %231 = vst [vmem:[#allocation2 + $0x58] sm:$0xff] 0.0
          %232 = vst [vmem:[#allocation2 + $0x60] sm:$0xff] 0.0
          %233 = vst [vmem:[#allocation2 + $0x68] sm:$0xff] 0.0
          %234 = vst [vmem:[#allocation2 + $0x70] sm:$0xff] 0.0
          %235 = vst [vmem:[#allocation2 + $0x78] sm:$0xff] 0.0
          %236 = vst [vmem:[#allocation2 + $0x80] sm:$0xff] 0.0
          %237 = vst [vmem:[#allocation2 + $0x88] sm:$0xff] 0.0
          %238 = vst [vmem:[#allocation2 + $0x90] sm:$0xff] 0.0
          %239 = vst [vmem:[#allocation2 + $0x98] sm:$0xff] 0.0
          %240 = vst [vmem:[#allocation2 + $0xa0] sm:$0xff] 0.0
          %241 = vst [vmem:[#allocation2 + $0xa8] sm:$0xff] 0.0
          %242 = vst [vmem:[#allocation2 + $0xb0] sm:$0xff] 0.0
          %243 = vst [vmem:[#allocation2 + $0xb8] sm:$0xff] 0.0
          %244 = vst [vmem:[#allocation2 + $0xc0] sm:$0xff] 0.0
          %245 = vst [vmem:[#allocation2 + $0xc8] sm:$0xff] 0.0
          %246 = vst [vmem:[#allocation2 + $0xd0] sm:$0xff] 0.0
          %247 = vst [vmem:[#allocation2 + $0xd8] sm:$0xff] 0.0
          %248 = vst [vmem:[#allocation2 + $0xe0] sm:$0xff] 0.0
          %249 = vst [vmem:[#allocation2 + $0xe8] sm:$0xff] 0.0
          %250 = vst [vmem:[#allocation2 + $0xf0] sm:$0xff] 0.0
          %251 = vst [vmem:[#allocation2 + $0xf8] sm:$0xff] 0.0
        $region40: #{tpu_custom_call.1} parent=27 // pred_fallthru
          _
        %v252 = vld [vmem:[#allocation2] sm:$0xff]
        %v253 = vld [vmem:[#allocation2 + $0x8] sm:$0xff]
        %v254 = vld [vmem:[#allocation2 + $0x10] sm:$0xff]
        %v255 = vld [vmem:[#allocation2 + $0x18] sm:$0xff]
        %v256 = vld [vmem:[#allocation2 + $0x20] sm:$0xff]
        %v257 = vld [vmem:[#allocation2 + $0x28] sm:$0xff]
        %v258 = vld [vmem:[#allocation2 + $0x30] sm:$0xff]
        %v259 = vld [vmem:[#allocation2 + $0x38] sm:$0xff]
        %v260 = vld [vmem:[#allocation2 + $0x40] sm:$0xff]
        %v261 = vld [vmem:[#allocation2 + $0x48] sm:$0xff]
        %v262 = vld [vmem:[#allocation2 + $0x50] sm:$0xff]
        %v263 = vld [vmem:[#allocation2 + $0x58] sm:$0xff]
        %v264 = vld [vmem:[#allocation2 + $0x60] sm:$0xff]
        %v265 = vld [vmem:[#allocation2 + $0x68] sm:$0xff]
        %v266 = vld [vmem:[#allocation2 + $0x70] sm:$0xff]
        %v267 = vld [vmem:[#allocation2 + $0x78] sm:$0xff]
        %v268 = vld [vmem:[#allocation2 + $0x80] sm:$0xff]
        %v269 = vld [vmem:[#allocation2 + $0x88] sm:$0xff]
        %v270 = vld [vmem:[#allocation2 + $0x90] sm:$0xff]
        %v271 = vld [vmem:[#allocation2 + $0x98] sm:$0xff]
        %v272 = vld [vmem:[#allocation2 + $0xa0] sm:$0xff]
        %v273 = vld [vmem:[#allocation2 + $0xa8] sm:$0xff]
        %v274 = vld [vmem:[#allocation2 + $0xb0] sm:$0xff]
        %v275 = vld [vmem:[#allocation2 + $0xb8] sm:$0xff]
        %v276 = vld [vmem:[#allocation2 + $0xc0] sm:$0xff]
        %v277 = vld [vmem:[#allocation2 + $0xc8] sm:$0xff]
        %v278 = vld [vmem:[#allocation2 + $0xd0] sm:$0xff]
        %v279 = vld [vmem:[#allocation2 + $0xd8] sm:$0xff]
        %v280 = vld [vmem:[#allocation2 + $0xe0] sm:$0xff]
        %v281 = vld [vmem:[#allocation2 + $0xe8] sm:$0xff]
        %v282 = vld [vmem:[#allocation2 + $0xf0] sm:$0xff]
        %v283 = vld [vmem:[#allocation2 + $0xf8] sm:$0xff]
        %v284 = vld [vmem:[%s187] sm:$0xf]
        %v285 = vld [vmem:[%s187 + $0x4] sm:$0xf]
        %v286 = vld [vmem:[%s187 + $0x8] sm:$0xf]
        %v287 = vld [vmem:[%s187 + $0xc] sm:$0xf]
        %v288 = vld [vmem:[%s187 + $0x10] sm:$0xf]
        %v289 = vld [vmem:[%s187 + $0x14] sm:$0xf]
        %v290 = vld [vmem:[%s187 + $0x18] sm:$0xf]
        %v291 = vld [vmem:[%s187 + $0x1c] sm:$0xf]
        %v292 = vld [vmem:[%s187 + $0x20] sm:$0xf]
        %v293 = vld [vmem:[%s187 + $0x24] sm:$0xf]
        %v294 = vld [vmem:[%s187 + $0x28] sm:$0xf]
        %v295 = vld [vmem:[%s187 + $0x2c] sm:$0xf]
        %v296 = vld [vmem:[%s187 + $0x30] sm:$0xf]
        %v297 = vld [vmem:[%s187 + $0x34] sm:$0xf]
        %v298 = vld [vmem:[%s187 + $0x38] sm:$0xf]
        %v299 = vld [vmem:[%s187 + $0x3c] sm:$0xf]
        %v300 = vld [vmem:[%s187 + $0x40] sm:$0xf]
        %v301 = vld [vmem:[%s187 + $0x44] sm:$0xf]
        %v302 = vld [vmem:[%s187 + $0x48] sm:$0xf]
        %v303 = vld [vmem:[%s187 + $0x4c] sm:$0xf]
        %v304 = vld [vmem:[%s187 + $0x50] sm:$0xf]
        %v305 = vld [vmem:[%s187 + $0x54] sm:$0xf]
        %v306 = vld [vmem:[%s187 + $0x58] sm:$0xf]
        %v307 = vld [vmem:[%s187 + $0x5c] sm:$0xf]
        %v308 = vld [vmem:[%s187 + $0x60] sm:$0xf]
        %v309 = vld [vmem:[%s187 + $0x64] sm:$0xf]
        %v310 = vld [vmem:[%s187 + $0x68] sm:$0xf]
        %v311 = vld [vmem:[%s187 + $0x6c] sm:$0xf]
        %v312 = vld [vmem:[%s187 + $0x70] sm:$0xf]
        %v313 = vld [vmem:[%s187 + $0x74] sm:$0xf]
        %v314 = vld [vmem:[%s187 + $0x78] sm:$0xf]
        %v315 = vld [vmem:[%s187 + $0x7c] sm:$0xf]
        %v316 = vld [vmem:[#allocation6] sm:$0xf]
        %v317 = vld [vmem:[#allocation6 + $0x4] sm:$0x1]
        %v350 = vunpack.c.l.b16 %v284
        %v351 = vunpack.c.l.b16 %v285
        %v352 = vunpack.c.l.b16 %v286
        %v353 = vunpack.c.l.b16 %v287
        %v354 = vunpack.c.l.b16 %v288
        %v355 = vunpack.c.l.b16 %v289
        %v356 = vunpack.c.l.b16 %v290
        %v357 = vunpack.c.l.b16 %v291
        %v358 = vunpack.c.l.b16 %v292
        %v359 = vunpack.c.l.b16 %v293
        %v360 = vunpack.c.l.b16 %v294
        %v361 = vunpack.c.l.b16 %v295
        %v362 = vunpack.c.l.b16 %v296
        %v363 = vunpack.c.l.b16 %v297
        %v364 = vunpack.c.l.b16 %v298
        %v365 = vunpack.c.l.b16 %v299
        %v366 = vunpack.c.l.b16 %v300
        %v367 = vunpack.c.l.b16 %v301
        %v368 = vunpack.c.l.b16 %v302
        %v369 = vunpack.c.l.b16 %v303
        %v370 = vunpack.c.l.b16 %v304
        %v371 = vunpack.c.l.b16 %v305
        %v372 = vunpack.c.l.b16 %v306
        %v373 = vunpack.c.l.b16 %v307
        %v374 = vunpack.c.l.b16 %v308
        %v375 = vunpack.c.l.b16 %v309
        %v376 = vunpack.c.l.b16 %v310
        %v377 = vunpack.c.l.b16 %v311
        %v378 = vunpack.c.l.b16 %v312
        %v379 = vunpack.c.l.b16 %v313
        %v380 = vunpack.c.l.b16 %v314
        %v381 = vunpack.c.l.b16 %v315
        %v382 = vpack.c.b16 %v351, %v350
        %v383 = vpack.c.b16 %v353, %v352
        %v384 = vpack.c.b16 %v355, %v354
        %v385 = vpack.c.b16 %v357, %v356
        %v386 = vpack.c.b16 %v359, %v358
        %v387 = vpack.c.b16 %v361, %v360
        %v388 = vpack.c.b16 %v363, %v362
        %v389 = vpack.c.b16 %v365, %v364
        %v390 = vpack.c.b16 %v367, %v366
        %v391 = vpack.c.b16 %v369, %v368
        %v392 = vpack.c.b16 %v371, %v370
        %v393 = vpack.c.b16 %v373, %v372
        %v394 = vpack.c.b16 %v375, %v374
        %v395 = vpack.c.b16 %v377, %v376
        %v396 = vpack.c.b16 %v379, %v378
        %v397 = vpack.c.b16 %v381, %v380
        %v400 = vunpack.c.l.b16 %v316
        %v401 = vunpack.c.l.b16 %v317
        %v402 = vpack.c.b16 %v401, %v400
        %vm403 = vcmask 72704
        %v405 = vsel %vm403, %v382, 0
        %v408 = vsel %vm403, %v383, 0
        %v411 = vsel %vm403, %v384, 0
        %v414 = vsel %vm403, %v385, 0
        %v417 = vsel %vm403, %v386, 0
        %v420 = vsel %vm403, %v387, 0
        %v423 = vsel %vm403, %v388, 0
        %v426 = vsel %vm403, %v389, 0
        %v429 = vsel %vm403, %v390, 0
        %v432 = vsel %vm403, %v391, 0
        %v435 = vsel %vm403, %v392, 0
        %v438 = vsel %vm403, %v393, 0
        %v441 = vsel %vm403, %v394, 0
        %v444 = vsel %vm403, %v395, 0
        %v447 = vsel %vm403, %v396, 0
        %v450 = vsel %vm403, %v397, 0
        %vm452 = vcmask 1043456
        %vm453 = vcmask 1044480
        %v454 = vsel %vm452, 4294967295, 65535
        %v455 = vsel %vm453, %v454, 0
        %v457 = vand.u32 %v402, %v455
        %459 = vmatprep.subr.bf16.mxu0 0
        %460 = vmatpush1.bf16.msra.mxu0 %v457
        %461 = vmatprep.subr.bf16.mxu0 0
        %462 = vmatpush1.bf16.msra.mxu0 0
        %463 = vmatprep.subr.bf16.mxu0 0
        %464 = vmatpush1.bf16.msra.mxu0 0
        %465 = vmatprep.subr.bf16.mxu0 0
        %466 = vmatpush1.bf16.msra.mxu0 0
        %467 = vmatprep.subr.bf16.mxu0 0
        %468 = vmatpush1.bf16.msra.mxu0 0
        %469 = vmatprep.subr.bf16.mxu0 0
        %470 = vmatpush1.bf16.msra.mxu0 0
        %471 = vmatprep.subr.bf16.mxu0 0
        %472 = vmatpush1.bf16.msra.mxu0 0
        %473 = vmatprep.subr.bf16.mxu0 0
        %474 = vmatpush1.bf16.msra.mxu0 0
        %475 = vmatprep.subr.bf16.mxu0 0
        %476 = vmatpush1.bf16.msra.mxu0 0
        %477 = vmatprep.subr.bf16.mxu0 0
        %478 = vmatpush1.bf16.msra.mxu0 0
        %479 = vmatprep.subr.bf16.mxu0 0
        %480 = vmatpush1.bf16.msra.mxu0 0
        %481 = vmatprep.subr.bf16.mxu0 0
        %482 = vmatpush1.bf16.msra.mxu0 0
        %483 = vmatprep.subr.bf16.mxu0 0
        %484 = vmatpush1.bf16.msra.mxu0 0
        %485 = vmatprep.subr.bf16.mxu0 0
        %486 = vmatpush1.bf16.msra.mxu0 0
        %487 = vmatprep.subr.bf16.mxu0 0
        %488 = vmatpush1.bf16.msra.mxu0 0
        %489 = vmatprep.subr.bf16.mxu0 0
        %490 = vmatpush1.bf16.msra.mxu0 0
        %491 = vmatprep.mubr.bf16.mxu0 0
        %492 = vmatmul.mubr.bf16.gmra.mrb[0].mxu0 %v405
        %v493 = vpop.f32.mrb[0].mxu0
        %v494 = vadd.f32 0.0, %v493
        %v495 = vpop.f32.mrb[0].mxu0
        %v496 = vpop.f32.mrb[0].mxu0
        %v497 = vadd.f32 0.0, %v496
        %v498 = vpop.f32.mrb[0].mxu0
        %499 = vmatprep.mubr.bf16.mxu0 0
        %500 = vmatmul.mubr.bf16.gmra.mrb[0].mxu0 %v408
        %v501 = vpop.f32.mrb[0].mxu0
        %v502 = vadd.f32 0.0, %v501
        %v503 = vpop.f32.mrb[0].mxu0
        %v504 = vpop.f32.mrb[0].mxu0
        %v505 = vadd.f32 0.0, %v504
        %v506 = vpop.f32.mrb[0].mxu0
        %507 = vmatprep.mubr.bf16.mxu0 0
        %508 = vmatmul.mubr.bf16.gmra.mrb[0].mxu0 %v411
        %v509 = vpop.f32.mrb[0].mxu0
        %v510 = vadd.f32 0.0, %v509
        %v511 = vpop.f32.mrb[0].mxu0
        %v512 = vpop.f32.mrb[0].mxu0
        %v513 = vadd.f32 0.0, %v512
        %v514 = vpop.f32.mrb[0].mxu0
        %515 = vmatprep.mubr.bf16.mxu0 0
        %516 = vmatmul.mubr.bf16.gmra.mrb[0].mxu0 %v414
        %v517 = vpop.f32.mrb[0].mxu0
        %v518 = vadd.f32 0.0, %v517
        %v519 = vpop.f32.mrb[0].mxu0
        %v520 = vpop.f32.mrb[0].mxu0
        %v521 = vadd.f32 0.0, %v520
        %v522 = vpop.f32.mrb[0].mxu0
        %523 = vmatprep.mubr.bf16.mxu0 0
        %524 = vmatmul.mubr.bf16.gmra.mrb[0].mxu0 %v417
        %v525 = vpop.f32.mrb[0].mxu0
        %v526 = vadd.f32 0.0, %v525
        %v527 = vpop.f32.mrb[0].mxu0
        %v528 = vpop.f32.mrb[0].mxu0
        %v529 = vadd.f32 0.0, %v528
        %v530 = vpop.f32.mrb[0].mxu0
        %531 = vmatprep.mubr.bf16.mxu0 0
        %532 = vmatmul.mubr.bf16.gmra.mrb[0].mxu0 %v420
        %v533 = vpop.f32.mrb[0].mxu0
        %v534 = vadd.f32 0.0, %v533
        %v535 = vpop.f32.mrb[0].mxu0
        %v536 = vpop.f32.mrb[0].mxu0
        %v537 = vadd.f32 0.0, %v536
        %v538 = vpop.f32.mrb[0].mxu0
        %539 = vmatprep.mubr.bf16.mxu0 0
        %540 = vmatmul.mubr.bf16.gmra.mrb[0].mxu0 %v423
        %v541 = vpop.f32.mrb[0].mxu0
        %v542 = vadd.f32 0.0, %v541
        %v543 = vpop.f32.mrb[0].mxu0
        %v544 = vpop.f32.mrb[0].mxu0
        %v545 = vadd.f32 0.0, %v544
        %v546 = vpop.f32.mrb[0].mxu0
        %547 = vmatprep.mubr.bf16.mxu0 0
        %548 = vmatmul.mubr.bf16.gmra.mrb[0].mxu0 %v426
        %v549 = vpop.f32.mrb[0].mxu0
        %v550 = vadd.f32 0.0, %v549
        %v551 = vpop.f32.mrb[0].mxu0
        %v552 = vpop.f32.mrb[0].mxu0
        %v553 = vadd.f32 0.0, %v552
        %v554 = vpop.f32.mrb[0].mxu0
        %555 = vmatprep.mubr.bf16.mxu0 0
        %556 = vmatmul.mubr.bf16.gmra.mrb[0].mxu0 %v429
        %v557 = vpop.f32.mrb[0].mxu0
        %v558 = vadd.f32 0.0, %v557
        %v559 = vpop.f32.mrb[0].mxu0
        %v560 = vpop.f32.mrb[0].mxu0
        %v561 = vadd.f32 0.0, %v560
        %v562 = vpop.f32.mrb[0].mxu0
        %563 = vmatprep.mubr.bf16.mxu0 0
        %564 = vmatmul.mubr.bf16.gmra.mrb[0].mxu0 %v432
        %v565 = vpop.f32.mrb[0].mxu0
        %v566 = vadd.f32 0.0, %v565
        %v567 = vpop.f32.mrb[0].mxu0
        %v568 = vpop.f32.mrb[0].mxu0
        %v569 = vadd.f32 0.0, %v568
        %v570 = vpop.f32.mrb[0].mxu0
        %571 = vmatprep.mubr.bf16.mxu0 0
        %572 = vmatmul.mubr.bf16.gmra.mrb[0].mxu0 %v435
        %v573 = vpop.f32.mrb[0].mxu0
        %v574 = vadd.f32 0.0, %v573
        %v575 = vpop.f32.mrb[0].mxu0
        %v576 = vpop.f32.mrb[0].mxu0
        %v577 = vadd.f32 0.0, %v576
        %v578 = vpop.f32.mrb[0].mxu0
        %579 = vmatprep.mubr.bf16.mxu0 0
        %580 = vmatmul.mubr.bf16.gmra.mrb[0].mxu0 %v438
        %v581 = vpop.f32.mrb[0].mxu0
        %v582 = vadd.f32 0.0, %v581
        %v583 = vpop.f32.mrb[0].mxu0
        %v584 = vpop.f32.mrb[0].mxu0
        %v585 = vadd.f32 0.0, %v584
        %v586 = vpop.f32.mrb[0].mxu0
        %587 = vmatprep.mubr.bf16.mxu0 0
        %588 = vmatmul.mubr.bf16.gmra.mrb[0].mxu0 %v441
        %v589 = vpop.f32.mrb[0].mxu0
        %v590 = vadd.f32 0.0, %v589
        %v591 = vpop.f32.mrb[0].mxu0
        %v592 = vpop.f32.mrb[0].mxu0
        %v593 = vadd.f32 0.0, %v592
        %v594 = vpop.f32.mrb[0].mxu0
        %595 = vmatprep.mubr.bf16.mxu0 0
        %596 = vmatmul.mubr.bf16.gmra.mrb[0].mxu0 %v444
        %v597 = vpop.f32.mrb[0].mxu0
        %v598 = vadd.f32 0.0, %v597
        %v599 = vpop.f32.mrb[0].mxu0
        %v600 = vpop.f32.mrb[0].mxu0
        %v601 = vadd.f32 0.0, %v600
        %v602 = vpop.f32.mrb[0].mxu0
        %603 = vmatprep.mubr.bf16.mxu0 0
        %604 = vmatmul.mubr.bf16.gmra.mrb[0].mxu0 %v447
        %v605 = vpop.f32.mrb[0].mxu0
        %v606 = vadd.f32 0.0, %v605
        %v607 = vpop.f32.mrb[0].mxu0
        %v608 = vpop.f32.mrb[0].mxu0
        %v609 = vadd.f32 0.0, %v608
        %v610 = vpop.f32.mrb[0].mxu0
        %611 = vmatprep.mubr.bf16.mxu0 0
        %612 = vmatmul.mubr.bf16.gmra.mrb[0].mxu0 %v450
        %v613 = vpop.f32.mrb[0].mxu0
        %v614 = vadd.f32 0.0, %v613
        %v615 = vpop.f32.mrb[0].mxu0
        %v616 = vpop.f32.mrb[0].mxu0
        %v617 = vadd.f32 0.0, %v616
        %v618 = vpop.f32.mrb[0].mxu0
        %619 = vdwg.mxu0
        %v620 = vadd.f32 %v252, %v494
        %v621 = vadd.f32 %v253, %v497
        %v622 = vadd.f32 %v254, %v502
        %v623 = vadd.f32 %v255, %v505
        %v624 = vadd.f32 %v256, %v510
        %v625 = vadd.f32 %v257, %v513
        %v626 = vadd.f32 %v258, %v518
        %v627 = vadd.f32 %v259, %v521
        %v628 = vadd.f32 %v260, %v526
        %v629 = vadd.f32 %v261, %v529
        %v630 = vadd.f32 %v262, %v534
        %v631 = vadd.f32 %v263, %v537
        %v632 = vadd.f32 %v264, %v542
        %v633 = vadd.f32 %v265, %v545
        %v634 = vadd.f32 %v266, %v550
        %v635 = vadd.f32 %v267, %v553
        %v636 = vadd.f32 %v268, %v558
        %v637 = vadd.f32 %v269, %v561
        %v638 = vadd.f32 %v270, %v566
        %v639 = vadd.f32 %v271, %v569
        %v640 = vadd.f32 %v272, %v574
        %v641 = vadd.f32 %v273, %v577
        %v642 = vadd.f32 %v274, %v582
        %v643 = vadd.f32 %v275, %v585
        %v644 = vadd.f32 %v276, %v590
        %v645 = vadd.f32 %v277, %v593
        %v646 = vadd.f32 %v278, %v598
        %v647 = vadd.f32 %v279, %v601
        %v648 = vadd.f32 %v280, %v606
        %v649 = vadd.f32 %v281, %v609
        %v650 = vadd.f32 %v282, %v614
        %v651 = vadd.f32 %v283, %v617
        %652 = vst [vmem:[#allocation2] sm:$0xff] %v620
        %653 = vst [vmem:[#allocation2 + $0x8] sm:$0xff] %v621
        %654 = vst [vmem:[#allocation2 + $0x10] sm:$0xff] %v622
        %655 = vst [vmem:[#allocation2 + $0x18] sm:$0xff] %v623
        %656 = vst [vmem:[#allocation2 + $0x20] sm:$0xff] %v624
        %657 = vst [vmem:[#allocation2 + $0x28] sm:$0xff] %v625
        %658 = vst [vmem:[#allocation2 + $0x30] sm:$0xff] %v626
        %659 = vst [vmem:[#allocation2 + $0x38] sm:$0xff] %v627
        %660 = vst [vmem:[#allocation2 + $0x40] sm:$0xff] %v628
        %661 = vst [vmem:[#allocation2 + $0x48] sm:$0xff] %v629
        %662 = vst [vmem:[#allocation2 + $0x50] sm:$0xff] %v630
        %663 = vst [vmem:[#allocation2 + $0x58] sm:$0xff] %v631
        %664 = vst [vmem:[#allocation2 + $0x60] sm:$0xff] %v632
        %665 = vst [vmem:[#allocation2 + $0x68] sm:$0xff] %v633
        %666 = vst [vmem:[#allocation2 + $0x70] sm:$0xff] %v634
        %667 = vst [vmem:[#allocation2 + $0x78] sm:$0xff] %v635
        %668 = vst [vmem:[#allocation2 + $0x80] sm:$0xff] %v636
        %669 = vst [vmem:[#allocation2 + $0x88] sm:$0xff] %v637
        %670 = vst [vmem:[#allocation2 + $0x90] sm:$0xff] %v638
        %671 = vst [vmem:[#allocation2 + $0x98] sm:$0xff] %v639
        %672 = vst [vmem:[#allocation2 + $0xa0] sm:$0xff] %v640
        %673 = vst [vmem:[#allocation2 + $0xa8] sm:$0xff] %v641
        %674 = vst [vmem:[#allocation2 + $0xb0] sm:$0xff] %v642
        %675 = vst [vmem:[#allocation2 + $0xb8] sm:$0xff] %v643
        %676 = vst [vmem:[#allocation2 + $0xc0] sm:$0xff] %v644
        %677 = vst [vmem:[#allocation2 + $0xc8] sm:$0xff] %v645
        %678 = vst [vmem:[#allocation2 + $0xd0] sm:$0xff] %v646
        %679 = vst [vmem:[#allocation2 + $0xd8] sm:$0xff] %v647
        %680 = vst [vmem:[#allocation2 + $0xe0] sm:$0xff] %v648
        %681 = vst [vmem:[#allocation2 + $0xe8] sm:$0xff] %v649
        %682 = vst [vmem:[#allocation2 + $0xf0] sm:$0xff] %v650
        %683 = vst [vmem:[#allocation2 + $0xf8] sm:$0xff] %v651
        // Predicated region
        $region41: #{tpu_custom_call.1} parent=27 // pred_check
          %p684 = pneg %p216
        $region42: #{tpu_custom_call.1} parent=27 // pred_check_branch
          %686 = sbr.rel (%p684) target = $region44
        $region43: #{tpu_custom_call.1} parent=27 // pred_region
          %v687 = vld [vmem:[#allocation2] sm:$0xff]
          %v688 = vld [vmem:[#allocation2 + $0x8] sm:$0xff]
          %v689 = vld [vmem:[#allocation2 + $0x10] sm:$0xff]
          %v690 = vld [vmem:[#allocation2 + $0x18] sm:$0xff]
          %v691 = vld [vmem:[#allocation2 + $0x20] sm:$0xff]
          %v692 = vld [vmem:[#allocation2 + $0x28] sm:$0xff]
          %v693 = vld [vmem:[#allocation2 + $0x30] sm:$0xff]
          %v694 = vld [vmem:[#allocation2 + $0x38] sm:$0xff]
          %v695 = vld [vmem:[#allocation2 + $0x40] sm:$0xff]
          %v696 = vld [vmem:[#allocation2 + $0x48] sm:$0xff]
          %v697 = vld [vmem:[#allocation2 + $0x50] sm:$0xff]
          %v698 = vld [vmem:[#allocation2 + $0x58] sm:$0xff]
          %v699 = vld [vmem:[#allocation2 + $0x60] sm:$0xff]
          %v700 = vld [vmem:[#allocation2 + $0x68] sm:$0xff]
          %v701 = vld [vmem:[#allocation2 + $0x70] sm:$0xff]
          %v702 = vld [vmem:[#allocation2 + $0x78] sm:$0xff]
          %v703 = vld [vmem:[#allocation2 + $0x80] sm:$0xff]
          %v704 = vld [vmem:[#allocation2 + $0x88] sm:$0xff]
          %v705 = vld [vmem:[#allocation2 + $0x90] sm:$0xff]
          %v706 = vld [vmem:[#allocation2 + $0x98] sm:$0xff]
          %v707 = vld [vmem:[#allocation2 + $0xa0] sm:$0xff]
          %v708 = vld [vmem:[#allocation2 + $0xa8] sm:$0xff]
          %v709 = vld [vmem:[#allocation2 + $0xb0] sm:$0xff]
          %v710 = vld [vmem:[#allocation2 + $0xb8] sm:$0xff]
          %v711 = vld [vmem:[#allocation2 + $0xc0] sm:$0xff]
          %v712 = vld [vmem:[#allocation2 + $0xc8] sm:$0xff]
          %v713 = vld [vmem:[#allocation2 + $0xd0] sm:$0xff]
          %v714 = vld [vmem:[#allocation2 + $0xd8] sm:$0xff]
          %v715 = vld [vmem:[#allocation2 + $0xe0] sm:$0xff]
          %v716 = vld [vmem:[#allocation2 + $0xe8] sm:$0xff]
          %v717 = vld [vmem:[#allocation2 + $0xf0] sm:$0xff]
          %v718 = vld [vmem:[#allocation2 + $0xf8] sm:$0xff]
          %v719 = vmax.f32 %v687, 0.0
          %v720 = vmax.f32 %v688, 0.0
          %v721 = vmax.f32 %v689, 0.0
          %v722 = vmax.f32 %v690, 0.0
          %v723 = vmax.f32 %v691, 0.0
          %v724 = vmax.f32 %v692, 0.0
          %v725 = vmax.f32 %v693, 0.0
          %v726 = vmax.f32 %v694, 0.0
          %v727 = vmax.f32 %v695, 0.0
          %v728 = vmax.f32 %v696, 0.0
          %v729 = vmax.f32 %v697, 0.0
          %v730 = vmax.f32 %v698, 0.0
          %v731 = vmax.f32 %v699, 0.0
          %v732 = vmax.f32 %v700, 0.0
          %v733 = vmax.f32 %v701, 0.0
          %v734 = vmax.f32 %v702, 0.0
          %v735 = vmax.f32 %v703, 0.0
          %v736 = vmax.f32 %v704, 0.0
          %v737 = vmax.f32 %v705, 0.0
          %v738 = vmax.f32 %v706, 0.0
          %v739 = vmax.f32 %v707, 0.0
          %v740 = vmax.f32 %v708, 0.0
          %v741 = vmax.f32 %v709, 0.0
          %v742 = vmax.f32 %v710, 0.0
          %v743 = vmax.f32 %v711, 0.0
          %v744 = vmax.f32 %v712, 0.0
          %v745 = vmax.f32 %v713, 0.0
          %v746 = vmax.f32 %v714, 0.0
          %v747 = vmax.f32 %v715, 0.0
          %v748 = vmax.f32 %v716, 0.0
          %v749 = vmax.f32 %v717, 0.0
          %v750 = vmax.f32 %v718, 0.0
          %751 = vst [vmem:[%s211] sm:$0xff] %v719
          %752 = vst [vmem:[%s211 + $0x8] sm:$0xff] %v720
          %753 = vst [vmem:[%s211 + $0x10] sm:$0xff] %v721
          %754 = vst [vmem:[%s211 + $0x18] sm:$0xff] %v722
          %755 = vst [vmem:[%s211 + $0x20] sm:$0xff] %v723
          %756 = vst [vmem:[%s211 + $0x28] sm:$0xff] %v724
          %757 = vst [vmem:[%s211 + $0x30] sm:$0xff] %v725
          %758 = vst [vmem:[%s211 + $0x38] sm:$0xff] %v726
          %759 = vst [vmem:[%s211 + $0x40] sm:$0xff] %v727
          %760 = vst [vmem:[%s211 + $0x48] sm:$0xff] %v728
          %761 = vst [vmem:[%s211 + $0x50] sm:$0xff] %v729
          %762 = vst [vmem:[%s211 + $0x58] sm:$0xff] %v730
          %763 = vst [vmem:[%s211 + $0x60] sm:$0xff] %v731
          %764 = vst [vmem:[%s211 + $0x68] sm:$0xff] %v732
          %765 = vst [vmem:[%s211 + $0x70] sm:$0xff] %v733
          %766 = vst [vmem:[%s211 + $0x78] sm:$0xff] %v734
          %767 = vst [vmem:[%s211 + $0x80] sm:$0xff] %v735
          %768 = vst [vmem:[%s211 + $0x88] sm:$0xff] %v736
          %769 = vst [vmem:[%s211 + $0x90] sm:$0xff] %v737
          %770 = vst [vmem:[%s211 + $0x98] sm:$0xff] %v738
          %771 = vst [vmem:[%s211 + $0xa0] sm:$0xff] %v739
          %772 = vst [vmem:[%s211 + $0xa8] sm:$0xff] %v740
          %773 = vst [vmem:[%s211 + $0xb0] sm:$0xff] %v741
          %774 = vst [vmem:[%s211 + $0xb8] sm:$0xff] %v742
          %775 = vst [vmem:[%s211 + $0xc0] sm:$0xff] %v743
          %776 = vst [vmem:[%s211 + $0xc8] sm:$0xff] %v744
          %777 = vst [vmem:[%s211 + $0xd0] sm:$0xff] %v745
          %778 = vst [vmem:[%s211 + $0xd8] sm:$0xff] %v746
          %779 = vst [vmem:[%s211 + $0xe0] sm:$0xff] %v747
          %780 = vst [vmem:[%s211 + $0xe8] sm:$0xff] %v748
          %781 = vst [vmem:[%s211 + $0xf0] sm:$0xff] %v749
          %782 = vst [vmem:[%s211 + $0xf8] sm:$0xff] %v750
        $region44: #{tpu_custom_call.1} parent=27 // pred_fallthru
          _
        %s783 = sand.u32 %s105, 1
        %s784 = scalar_lea.sflag [#allocation5], %s783
        %s785 = sand.u32 %s105, 1
        %s786 = smul.addr %s785, 256
        %s787 = scalar_lea.vmem [#allocation8], %s786
        // Predicated region
        $region45: #{tpu_custom_call.1} parent=27 // pred_check
          %p788 = pneg %p115
        $region46: #{tpu_custom_call.1} parent=27 // pred_check_branch
          %790 = sbr.rel (%p788) target = $region48
        $region47: #{tpu_custom_call.1} parent=27 // pred_region
          %s791 = smul.u32 32, %s25
          %s793 = ssub.s32 4096, 4096
          %794 = vsyncadd %s784, %s793
          %s795 = sadd.s32 %s26, %s791
          %s796 = smul.addr %s795, 128
          %s797 = scalar_lea.hbm %s2, %s796
          %s798 = sshll.u32 %s787, 4
          %s799 = int_to_ptr.vmem [resolvable:$true] %s798
          %804 = dma.vmem_to_hbm [thread:$0]  %s799, 4096, %s797, %s784, 128, 128, 8
        $region48: #{tpu_custom_call.1} parent=27 // pred_fallthru
          _
      $region28: #{tpu_custom_call.1} parent=5 // pred_fallthru
        _
      %p805 = scmp.le.s32.totalorder 2, %s15
      // Predicated region
      $region49: #{tpu_custom_call.1} parent=5 // pred_check
        %p806 = pneg %p805
      $region50: #{tpu_custom_call.1} parent=5 // pred_check_branch
        %808 = sbr.rel (%p806) target = $region52
      $region51: #{tpu_custom_call.1} parent=5 // pred_region
        %s809 = ssub.s32 %s15, 2
        // Predicated region
        $region53: #{tpu_custom_call.1} parent=51 // pred_check
          %p810 = pneg %p121
        $region54: #{tpu_custom_call.1} parent=51 // pred_check_branch
          %812 = sbr.rel (%p810) target = $region56
        $region55: #{tpu_custom_call.1} parent=51 // pred_region
          %s813 = sand.u32 %s106, 1
          %s814 = scalar_lea.sflag [#allocation5], %s813
          %s815 = sand.u32 %s106, 1
          %s816 = smul.addr %s815, 256
          %s817 = scalar_lea.vmem [#allocation8], %s816
          %818 = dma.done %s814, 4096
        $region56: #{tpu_custom_call.1} parent=51 // pred_fallthru
          _
      $region52: #{tpu_custom_call.1} parent=5 // pred_fallthru
        _
    $region6: #{tpu_custom_call.1} parent=1 // loop_footer
      %s19 = sadd.s32 1, %s15
    $region7: #{tpu_custom_call.1} parent=1 // loop_footer_branch
      %14 = sbr.rel target = $region3
    $region8: #{tpu_custom_call.1} parent=1 // loop_exit
      _
    %819 = vsyncpa [#allocation4], 1
    %s820 = scalar_lea.sflag [#allocation4], 1
    %821 = vsyncpa %s820, 1
    %822 = vsyncpa [#allocation7], 1
    %823 = vsyncpa [#allocation5], 1
    %s824 = scalar_lea.sflag [#allocation5], 1
    %825 = vsyncpa %s824, 1

</llo_original>
